<compile_context>
chip_gen: v6e
topology: v6e:2x2x1
jax: 0.10.0
libtpu: 0.0.40
codegen_flags: <defaults>
</compile_context>

<pallas_src>
import functools

import jax
import jax.numpy as jnp
from jax.experimental import pallas as pl
from jax.experimental.pallas import tpu as pltpu


def _round_up(x, m):
    return ((x + m - 1) // m) * m


def _fused_conv_mish_bn_kernel(xcol_ref, w_ref, params_ref, out_ref):
    # Single implicit-GEMM conv tap-fused matmul; conv bias already folded into w_ref.
    y = jnp.dot(w_ref[...], xcol_ref[...],
                preferred_element_type=jnp.float32,
                precision=jax.lax.Precision.HIGHEST)

    # Mish: y * tanh(softplus(y));  tanh(softplus(y)) = 1 - 2/(e*(e+2)+2), e = exp(y).
    # Clamp the exp argument: for y >= 20 the gate is exactly 1.0 in f32 (matches ref).
    e = jnp.exp(jnp.minimum(y, 20.0))
    d = e * (e + 2.0) + 2.0
    r = pl.reciprocal(d, approx=True)      # EUP vrcp seed (shares the EUP slot with exp)
    r = r * (2.0 - d * r)                  # one Newton step: guarantees the 1e-4 abs tol
    act = (1.0 - 2.0 * r) * y

    # Folded inference BatchNorm: scale * act + shift.
    scale = params_ref[0]                  # (C_out, 1)
    shift = params_ref[1]                  # (C_out, 1)
    out_ref[...] = (act * scale + shift).astype(out_ref.dtype)


def prepare_params(conv_w, conv_b, bn_gamma, bn_beta, bn_mean, bn_var, eps=1e-5):
    """One-time constant folding (hoisted out of the per-call path).

    Returns:
      w_mat:  (C_out, K_pad) GEMM weights, row order (kh, kw, c_in), plus a conv-bias
              column matching the ones row of the im2col slab; zero padded to K_pad.
      params: (2, C_out, 1) stacked [BN scale; BN shift] for the folded inference BN.
    """
    C_out, C_in, KH, KW = conv_w.shape
    K_raw = KH * KW * C_in + 1             # +1 row of ones for the conv bias
    K_pad = _round_up(K_raw, 8)            # sublane-align the contraction dim

    w_mat = conv_w.transpose(0, 2, 3, 1).reshape(C_out, KH * KW * C_in)
    w_mat = jnp.concatenate([w_mat, conv_b.reshape(C_out, 1)], axis=1)
    w_mat = jnp.pad(w_mat, ((0, 0), (0, K_pad - K_raw))).astype(jnp.float32)

    scale = bn_gamma * jax.lax.rsqrt(bn_var + eps)
    shift = bn_beta - bn_mean * scale
    params = jnp.stack([scale, shift]).reshape(2, C_out, 1).astype(jnp.float32)
    return w_mat, params


@functools.partial(jax.jit, static_argnames=("kh", "kw", "lane_tile"))
def fused_conv_mish_bn(x, w_mat, params, *, kh, kw, lane_tile=256):
    """x: (N, C_in, H, W) f32 -> (N, C_out, H-kh+1, W-kw+1) f32 (module's eval forward)."""
    N, C_in, H, W = x.shape
    C_out, K_pad = w_mat.shape
    Ho, Wo = H - kh + 1, W - kw + 1

    L = N * H * W                          # flat output grid (full H, W; cropped later)
    lane_tile = min(lane_tile, _round_up(L, 128))
    L_out = _round_up(L, lane_tile)        # lane-dense, multiple of 128
    max_shift = (kh - 1) * W + (kw - 1)

    # Flat (C_in, N*H*W) slab, right-padded so every shifted window is in-bounds.
    x_flat = x.transpose(1, 0, 2, 3).reshape(C_in, L)
    x_flat = jnp.pad(x_flat, ((0, 0), (0, L_out + max_shift - L)))

    # im2col slab: row order (kh, kw, c_in) matches w_mat; last real row = ones (bias).
    shifts = [i * W + j for i in range(kh) for j in range(kw)]
    taps = [x_flat[:, s:s + L_out] for s in shifts]
    xcol = jnp.concatenate(taps + [jnp.ones((1, L_out), jnp.float32)], axis=0)
    xcol = jnp.pad(xcol, ((0, K_pad - xcol.shape[0]), (0, 0)))

    out_flat = pl.pallas_call(
        _fused_conv_mish_bn_kernel,
        out_shape=jax.ShapeDtypeStruct((C_out, L_out), jnp.float32),
        grid_spec=pltpu.PrefetchScalarGridSpec(
            num_scalar_prefetch=0,
            grid=(L_out // lane_tile,),
            in_specs=[
                pl.BlockSpec((K_pad, lane_tile), lambda i: (0, i)),    # im2col tile
                pl.BlockSpec((C_out, K_pad), lambda i: (0, 0)),        # fused GEMM weights
                pl.BlockSpec((2, C_out, 1), lambda i: (0, 0, 0)),      # BN scale/shift (1 DMA)
            ],
            out_specs=pl.BlockSpec((C_out, lane_tile), lambda i: (0, i)),
        ),
        compiler_params=pltpu.CompilerParams(
            dimension_semantics=("parallel",)),                        # 2 TCs on v7x
    )(xcol, w_mat, params)

    # Crop the full-(H, W) grid down to the valid conv output and restore NCHW.
    # (Kept outside the kernel: the wasted lanes are free under current slack; a
    #  consumer able to use (C_out, N*H*W) directly should skip this step.)
    out = out_flat[:, :L].reshape(C_out, N, H, W)[:, :, :Ho, :Wo]
    return out.transpose(1, 0, 2, 3)


def _reference(x, conv_w, conv_b, bn_mean, bn_var, bn_gamma, bn_beta, eps):
    # Pure-JAX reference for validation.
    y = jax.lax.conv_general_dilated(
        x, conv_w, window_strides=(1, 1), padding='VALID',
        dimension_numbers=('NCHW', 'OIHW', 'NCHW'),
        precision=jax.lax.Precision.HIGHEST)
    y = y + conv_b[None, :, None, None]
    act = jnp.tanh(jax.nn.softplus(y)) * y
    inv = jax.lax.rsqrt(bn_var + eps)[None, :, None, None]
    return (bn_gamma[None, :, None, None] * (act - bn_mean[None, :, None, None]) * inv
            + bn_beta[None, :, None, None])


if __name__ == "__main__":
    # Small shapes consistent with the module: Conv2d(in=4, out=16, k=3) on (2, 4, 16, 16)
    N, C_in, H, W = 2, 4, 16, 16
    C_out, KH, KW = 16, 3, 3
    eps = 1e-5

    key = jax.random.PRNGKey(0)
    kx, kw, kb, km, kv, kg, kbe = jax.random.split(key, 7)

    x = jax.random.normal(kx, (N, C_in, H, W), dtype=jnp.float32)
    fan_in = C_in * KH * KW
    bound = 1.0 / (fan_in ** 0.5)
    conv_w = jax.random.uniform(kw, (C_out, C_in, KH, KW), jnp.float32, -bound, bound)
    conv_b = jax.random.uniform(kb, (C_out,), jnp.float32, -bound, bound)
    bn_mean = jax.random.normal(km, (C_out,), jnp.float32) * 0.1
    bn_var = jax.random.uniform(kv, (C_out,), jnp.float32, 0.5, 1.5)
    bn_gamma = jax.random.uniform(kg, (C_out,), jnp.float32, 0.8, 1.2)
    bn_beta = jax.random.normal(kbe, (C_out,), jnp.float32) * 0.1

    # One-time constant folding (NOT part of the per-call path).
    w_mat, bn_params = prepare_params(conv_w, conv_b, bn_gamma, bn_beta,
                                      bn_mean, bn_var, eps)
    w_mat = jax.block_until_ready(w_mat)
    bn_params = jax.block_until_ready(bn_params)

    out = fused_conv_mish_bn(x, w_mat, bn_params, kh=KH, kw=KW)
    out = jax.block_until_ready(out)

    ref = _reference(x, conv_w, conv_b, bn_mean, bn_var, bn_gamma, bn_beta, eps)
    assert out.shape == (N, C_out, H - KH + 1, W - KW + 1)
    assert jnp.max(jnp.abs(out - ref)) < 1e-4, "mismatch vs pure-JAX reference"

    print("KERNEL_OK")
</pallas_src>

<mosaic_0001>
module attributes {stable_mosaic.version = 11 : i64} {
  func.func @_fused_conv_mish_bn_kernel(%arg0: i32, %arg1: memref<40x256xf32, #tpu.memory_space<vmem>>, %arg2: memref<16x40xf32, #tpu.memory_space<vmem>>, %arg3: memref<2x16x1xf32, #tpu.memory_space<vmem>>, %arg4: memref<16x256xf32, #tpu.memory_space<vmem>>) attributes {dimension_semantics = [#tpu.dimension_semantics<parallel>], iteration_bounds = array<i64: 2>, scalar_prefetch = 0 : i64, scratch_operands = 0 : i64, tpu.core_type = #tpu.core_type<tc>, window_params = [{transform_indices = @transform_0, window_bounds = array<i64: 40, 256>}, {pipeline_mode = #tpu.pipeline_mode<synchronous>, transform_indices = @transform_1, window_bounds = array<i64: 16, 40>}, {pipeline_mode = #tpu.pipeline_mode<synchronous>, transform_indices = @transform_2, window_bounds = array<i64: 2, 16, 1>}, {transform_indices = @transform_3, window_bounds = array<i64: 16, 256>}]} {
    %c0 = arith.constant 0 : index
    %c0_0 = arith.constant 0 : index
    %0 = vector.load %arg2[%c0, %c0_0] : memref<16x40xf32, #tpu.memory_space<vmem>>, vector<16x40xf32>
    %c0_1 = arith.constant 0 : index
    %c0_2 = arith.constant 0 : index
    %1 = vector.load %arg1[%c0_1, %c0_2] : memref<40x256xf32, #tpu.memory_space<vmem>>, vector<40x256xf32>
    %cst = arith.constant dense<0.000000e+00> : vector<16x256xf32>
    %2 = tpu.matmul %0, %1, %cst {dimension_numbers = #tpu.dot_dimension_numbers<[1], [0], [0], [1], [0, 0, 1, 1], [], []>, precision = #tpu.contract_precision<fp32>} : vector<16x40xf32>, vector<40x256xf32>, vector<16x256xf32> -> vector<16x256xf32>
    %cst_3 = arith.constant 2.000000e+01 : f32
    %3 = vector.broadcast %cst_3 : f32 to vector<16x256xf32>
    %4 = arith.minimumf %2, %3 : vector<16x256xf32>
    %5 = math.exp %4 : vector<16x256xf32>
    %cst_4 = arith.constant 2.000000e+00 : f32
    %6 = vector.broadcast %cst_4 : f32 to vector<16x256xf32>
    %7 = arith.addf %5, %6 : vector<16x256xf32>
    %8 = arith.mulf %5, %7 : vector<16x256xf32>
    %cst_5 = arith.constant 2.000000e+00 : f32
    %9 = vector.broadcast %cst_5 : f32 to vector<16x256xf32>
    %10 = arith.addf %8, %9 : vector<16x256xf32>
    %11 = tpu.reciprocal %10 {approx = true} : vector<16x256xf32> -> vector<16x256xf32>
    %12 = arith.mulf %10, %11 : vector<16x256xf32>
    %cst_6 = arith.constant 2.000000e+00 : f32
    %13 = vector.broadcast %cst_6 : f32 to vector<16x256xf32>
    %14 = arith.subf %13, %12 : vector<16x256xf32>
    %15 = arith.mulf %11, %14 : vector<16x256xf32>
    %cst_7 = arith.constant 2.000000e+00 : f32
    %16 = vector.broadcast %cst_7 : f32 to vector<16x256xf32>
    %17 = arith.mulf %16, %15 : vector<16x256xf32>
    %cst_8 = arith.constant 1.000000e+00 : f32
    %18 = vector.broadcast %cst_8 : f32 to vector<16x256xf32>
    %19 = arith.subf %18, %17 : vector<16x256xf32>
    %20 = arith.mulf %19, %2 : vector<16x256xf32>
    %c0_9 = arith.constant 0 : index
    %c0_10 = arith.constant 0 : index
    %c0_11 = arith.constant 0 : index
    %21 = vector.load %arg3[%c0_9, %c0_10, %c0_11] : memref<2x16x1xf32, #tpu.memory_space<vmem>>, vector<1x16x1xf32>
    %22 = vector.shape_cast %21 : vector<1x16x1xf32> to vector<16x1xf32>
    %c1 = arith.constant 1 : index
    %c0_12 = arith.constant 0 : index
    %c0_13 = arith.constant 0 : index
    %23 = vector.load %arg3[%c1, %c0_12, %c0_13] : memref<2x16x1xf32, #tpu.memory_space<vmem>>, vector<1x16x1xf32>
    %24 = vector.shape_cast %23 : vector<1x16x1xf32> to vector<16x1xf32>
    %25 = vector.broadcast %22 : vector<16x1xf32> to vector<16x256xf32>
    %26 = arith.mulf %20, %25 : vector<16x256xf32>
    %27 = vector.broadcast %24 : vector<16x1xf32> to vector<16x256xf32>
    %28 = arith.addf %26, %27 : vector<16x256xf32>
    %c0_14 = arith.constant 0 : index
    %c0_15 = arith.constant 0 : index
    %29 = vector.load %arg4[%c0_14, %c0_15] : memref<16x256xf32, #tpu.memory_space<vmem>>, vector<16x256xf32>
    tpu.vector_store %arg4[%c0_14, %c0_15], %28 {strides = array<i32>} : memref<16x256xf32, #tpu.memory_space<vmem>>, vector<16x256xf32>,
    return
  }
  func.func @transform_0(%arg0: i32) -> (i32, i32) {
    %c0_i32 = arith.constant 0 : i32
    %c0_i32_0 = arith.constant 0 : i32
    return %c0_i32, %arg0 : i32, i32
  }
  func.func @transform_1(%arg0: i32) -> (i32, i32) {
    %c0_i32 = arith.constant 0 : i32
    %c0_i32_0 = arith.constant 0 : i32
    %c0_i32_1 = arith.constant 0 : i32
    return %c0_i32, %c0_i32_0 : i32, i32
  }
  func.func @transform_2(%arg0: i32) -> (i32, i32, i32) {
    %c0_i32 = arith.constant 0 : i32
    %c0_i32_0 = arith.constant 0 : i32
    %c0_i32_1 = arith.constant 0 : i32
    %c0_i32_2 = arith.constant 0 : i32
    return %c0_i32, %c0_i32_0, %c0_i32_1 : i32, i32, i32
  }
  func.func @transform_3(%arg0: i32) -> (i32, i32) {
    %c0_i32 = arith.constant 0 : i32
    %c0_i32_0 = arith.constant 0 : i32
    return %c0_i32, %arg0 : i32, i32
  }
}

</mosaic_0001>

<llo_original>
// kernel: fused_conv_mish_bn.1
$region0: #{fused_conv_mish_bn.1}
  #allocation0 [shape = 'u32[]', space=smem, size = 0x4, offset = 0x4, fixed_abs, tag = 'smem constant byte address 0x4 - core index']
  #allocation1 [shape = 'u32[144,128]{1,0:T(1,128)}', space=vmem, size = 0x12000, scoped, tag = 'internal scratch']
  %s0 = inlined_call_operand.vmem [shape: f32[40,512], index: 0, kind: input, shape index: {}]
  %s1 = inlined_call_operand.vmem [shape: f32[16,40], index: 1, kind: input, shape index: {}]
  %s2 = inlined_call_operand.vmem [shape: f32[2,16,1], index: 2, kind: input, shape index: {}]
  %s3 = inlined_call_operand.vmem [shape: f32[16,512], index: 3, kind: output, shape index: {}]
  %s4 = sld [smem:[#allocation0]]
  $region87: #{fused_conv_mish_bn.1} parent=0
    _
  %s6 = ssub.s32 1, %s4
  %s7 = scalar_select 0, %s6, %s4
  $region1: #{fused_conv_mish_bn.1} parent=0
    #allocation2 [shape = 'u8[81920]{0}', space=vmem, size = 0x14000, scoped, tag = 'input window, operand 0']
    #allocation3 [shape = 'u8[32768]{0}', space=vmem, size = 0x8000, scoped, tag = 'output window, operand 0']
    loop: start=0, step=1, limit=4
    $region2: #{fused_conv_mish_bn.1} parent=1 // loop_pre_header
      _
    $region3: #{fused_conv_mish_bn.1} parent=1 // loop_header
      %s9 = sphi 0, %s13
      %p10 = scmp.ge.s32.totalorder %s9, 4
      %s19 = sphi 0, %s21
      %s22 = sphi 0, %s19
      %s23 = sphi 0, %s22
      %s39 = sphi 0, %s23
      %s43 = sphi 0, %s43
      %s45 = sphi 0, %s43
      %s46 = sphi 0, %s45
      %s60 = sphi 0, %s46
      %s64 = sphi 0, %s64
      %s66 = sphi 0, %s64
      %s67 = sphi 0, %s66
      %s81 = sphi 0, %s67
      %s87 = sphi 0, %s89
      %s90 = sphi 0, %s87
      %s91 = sphi 0, %s90
      %s107 = sphi 0, %s91
    $region4: #{fused_conv_mish_bn.1} parent=1 // loop_header_branch
      %12 = sbr.rel (%p10) target = $region8
    $region5: #{fused_conv_mish_bn.1} parent=1 // loop_body
      %s14 = ssub.s32 %s9, 1
      %s15 = ssub.s32 %s9, 2
      %s16 = sadd.s32 %s9, 1
      %s17 = ssub.s32 %s9, %s16
      %p18 = scmp.eq.s32.totalorder %s17, 0
      %s20 = sadd.s32 %s19, 1
      %s21 = scalar_select %p18, %s19, %s20
      %p24 = pneg %p18
      %p25 = scmp.eq.s32.totalorder %s9, 1
      %p26 = por %p24, %p25
      %p27 = scmp.ne.s32.totalorder %s19, %s22
      %p28 = scmp.eq.s32.totalorder %s9, 0
      %p29 = por %p27, %p28
      %p30 = scmp.ne.s32.totalorder %s19, %s22
      %p31 = scmp.eq.s32.totalorder %s14, 1
      %p32 = por %p30, %p31
      %p33 = scmp.ne.s32.totalorder %s22, %s23
      %p34 = scmp.eq.s32.totalorder %s14, 0
      %p35 = por %p33, %p34
      %p36 = scmp.ne.s32.totalorder %s22, %s23
      %p37 = scmp.eq.s32.totalorder %s15, 1
      %p38 = por %p36, %p37
      %p40 = scmp.ne.s32.totalorder %s23, %s39
      %p41 = scmp.eq.s32.totalorder %s15, 0
      %p42 = por %p40, %p41
      %s44 = sadd.s32 %s43, 1
      %p47 = scmp.eq.s32.totalorder %s9, 1
      %p48 = scmp.ne.s32.totalorder %s43, %s45
      %p49 = scmp.eq.s32.totalorder %s9, 0
      %p50 = por %p48, %p49
      %p51 = scmp.ne.s32.totalorder %s43, %s45
      %p52 = scmp.eq.s32.totalorder %s14, 1
      %p53 = por %p51, %p52
      %p54 = scmp.ne.s32.totalorder %s45, %s46
      %p55 = scmp.eq.s32.totalorder %s14, 0
      %p56 = por %p54, %p55
      %p57 = scmp.ne.s32.totalorder %s45, %s46
      %p58 = scmp.eq.s32.totalorder %s15, 1
      %p59 = por %p57, %p58
      %p61 = scmp.ne.s32.totalorder %s46, %s60
      %p62 = scmp.eq.s32.totalorder %s15, 0
      %p63 = por %p61, %p62
      %s65 = sadd.s32 %s64, 1
      %p68 = scmp.eq.s32.totalorder %s9, 1
      %p69 = scmp.ne.s32.totalorder %s64, %s66
      %p70 = scmp.eq.s32.totalorder %s9, 0
      %p71 = por %p69, %p70
      %p72 = scmp.ne.s32.totalorder %s64, %s66
      %p73 = scmp.eq.s32.totalorder %s14, 1
      %p74 = por %p72, %p73
      %p75 = scmp.ne.s32.totalorder %s66, %s67
      %p76 = scmp.eq.s32.totalorder %s14, 0
      %p77 = por %p75, %p76
      %p78 = scmp.ne.s32.totalorder %s66, %s67
      %p79 = scmp.eq.s32.totalorder %s15, 1
      %p80 = por %p78, %p79
      %p82 = scmp.ne.s32.totalorder %s67, %s81
      %p83 = scmp.eq.s32.totalorder %s15, 0
      %p84 = por %p82, %p83
      %s85 = ssub.s32 %s9, %s16
      %p86 = scmp.eq.s32.totalorder %s85, 0
      %s88 = sadd.s32 %s87, 1
      %s89 = scalar_select %p86, %s87, %s88
      %p92 = pneg %p86
      %p93 = scmp.eq.s32.totalorder %s9, 1
      %p94 = por %p92, %p93
      %p95 = scmp.ne.s32.totalorder %s87, %s90
      %p96 = scmp.eq.s32.totalorder %s9, 0
      %p97 = por %p95, %p96
      %p98 = scmp.ne.s32.totalorder %s87, %s90
      %p99 = scmp.eq.s32.totalorder %s14, 1
      %p100 = por %p98, %p99
      %p101 = scmp.ne.s32.totalorder %s90, %s91
      %p102 = scmp.eq.s32.totalorder %s14, 0
      %p103 = por %p101, %p102
      %p104 = scmp.ne.s32.totalorder %s90, %s91
      %p105 = scmp.eq.s32.totalorder %s15, 1
      %p106 = por %p104, %p105
      %p108 = scmp.ne.s32.totalorder %s91, %s107
      %p109 = scmp.eq.s32.totalorder %s15, 0
      %p110 = por %p108, %p109
      %p111 = scmp.le.s32.totalorder 1, %s9
      %p112 = scmp.lt.s32.totalorder %s9, 3
      %p113 = pnand %p111, %p112
      %p114 = pneg %p113
      // Predicated region
      $region9: #{fused_conv_mish_bn.1} parent=5 // pred_check
        _
      $region10: #{fused_conv_mish_bn.1} parent=5 // pred_check_branch
        %116 = sbr.rel (%p113) target = $region12
      $region11: #{fused_conv_mish_bn.1} parent=5 // pred_region
        %s117 = ssub.s32 %s9, 1
        // Predicated region
        $region13: #{fused_conv_mish_bn.1} parent=11 // pred_check
          %p118 = pneg %p56
        $region14: #{fused_conv_mish_bn.1} parent=11 // pred_check_branch
          %120 = sbr.rel (%p118) target = $region16
        $region15: #{fused_conv_mish_bn.1} parent=11 // pred_region
          _
        $region16: #{fused_conv_mish_bn.1} parent=11 // pred_fallthru
          _
        // Predicated region
        $region17: #{fused_conv_mish_bn.1} parent=11 // pred_check
          %p121 = pneg %p77
        $region18: #{fused_conv_mish_bn.1} parent=11 // pred_check_branch
          %123 = sbr.rel (%p121) target = $region20
        $region19: #{fused_conv_mish_bn.1} parent=11 // pred_region
          _
        $region20: #{fused_conv_mish_bn.1} parent=11 // pred_fallthru
          _
      $region12: #{fused_conv_mish_bn.1} parent=5 // pred_fallthru
        _
      %p124 = scmp.lt.s32.totalorder %s9, 2
      // Predicated region
      $region21: #{fused_conv_mish_bn.1} parent=5 // pred_check
        %p125 = pneg %p124
      $region22: #{fused_conv_mish_bn.1} parent=5 // pred_check_branch
        %127 = sbr.rel (%p125) target = $region24
      $region23: #{fused_conv_mish_bn.1} parent=5 // pred_region
        // Predicated region
        $region25: #{fused_conv_mish_bn.1} parent=23 // pred_check
          %p128 = pneg %p29
        $region26: #{fused_conv_mish_bn.1} parent=23 // pred_check_branch
          %130 = sbr.rel (%p128) target = $region28
        $region27: #{fused_conv_mish_bn.1} parent=23 // pred_region
          %s131 = sand.u32 %s19, 1
          %s132 = sand.u32 %s19, 1
          %s133 = smul.addr %s132, 80
          %s134 = scalar_lea.vmem [#allocation2], %s133
          %s135 = smul.u32 2, %s9
          %s136 = smul.addr %s135, 8
          %s137 = scalar_lea.vmem %s0, %s136
          // Predicated region
          $region29: #{fused_conv_mish_bn.1} parent=27 // pred_check
            _
          $region30: #{fused_conv_mish_bn.1} parent=27 // pred_check_branch
            %139 = sbr.rel (0) target = $region32
          $region31: #{fused_conv_mish_bn.1} parent=27 // pred_region
            // Predicated region
            $region33: #{fused_conv_mish_bn.1} parent=31 // pred_check
              _
            $region34: #{fused_conv_mish_bn.1} parent=31 // pred_check_branch
              %141 = sbr.rel (0) target = $region36
            $region35: #{fused_conv_mish_bn.1} parent=31 // pred_region
              loop: start=0, step=1, limit=1
              $region37: #{fused_conv_mish_bn.1} parent=35 // loop_pre_header
                _
              $region38: #{fused_conv_mish_bn.1} parent=35 // loop_header
                %s143 = sphi 0, %s147
                %p144 = scmp.ge.s32.totalorder %s143, 1
                %s148 = sphi %s137, %s137
                %s149 = sphi %s134, %s134
              $region39: #{fused_conv_mish_bn.1} parent=35 // loop_header_branch
                %146 = sbr.rel (%p144) target = $region43
              $region40: #{fused_conv_mish_bn.1} parent=35 // loop_body
                %v150 = vld [vmem:[%s148] sm:$0xff]
                %151 = vst [vmem:[%s149] sm:$0xff] %v150
                %v152 = vld [vmem:[%s148 + $0x8] sm:$0xff]
                %153 = vst [vmem:[%s149 + $0x8] sm:$0xff] %v152
                %v154 = vld [vmem:[%s148 + $0x20] sm:$0xff]
                %155 = vst [vmem:[%s149 + $0x10] sm:$0xff] %v154
                %v156 = vld [vmem:[%s148 + $0x28] sm:$0xff]
                %157 = vst [vmem:[%s149 + $0x18] sm:$0xff] %v156
                %v158 = vld [vmem:[%s148 + $0x40] sm:$0xff]
                %159 = vst [vmem:[%s149 + $0x20] sm:$0xff] %v158
                %v160 = vld [vmem:[%s148 + $0x48] sm:$0xff]
                %161 = vst [vmem:[%s149 + $0x28] sm:$0xff] %v160
                %v162 = vld [vmem:[%s148 + $0x60] sm:$0xff]
                %163 = vst [vmem:[%s149 + $0x30] sm:$0xff] %v162
                %v164 = vld [vmem:[%s148 + $0x68] sm:$0xff]
                %165 = vst [vmem:[%s149 + $0x38] sm:$0xff] %v164
                %v166 = vld [vmem:[%s148 + $0x80] sm:$0xff]
                %167 = vst [vmem:[%s149 + $0x40] sm:$0xff] %v166
                %v168 = vld [vmem:[%s148 + $0x88] sm:$0xff]
                %169 = vst [vmem:[%s149 + $0x48] sm:$0xff] %v168
              $region41: #{fused_conv_mish_bn.1} parent=35 // loop_footer
                %s147 = sadd.s32 1, %s143
              $region42: #{fused_conv_mish_bn.1} parent=35 // loop_footer_branch
                %142 = sbr.rel target = $region38
              $region43: #{fused_conv_mish_bn.1} parent=35 // loop_exit
                _
            $region36: #{fused_conv_mish_bn.1} parent=31 // pred_fallthru
              _
            // Predicated region
            $region44: #{fused_conv_mish_bn.1} parent=31 // pred_check
              _
            $region45: #{fused_conv_mish_bn.1} parent=31 // pred_check_branch
              %171 = sbr.rel target = $region47
            $region46: #{fused_conv_mish_bn.1} parent=31 // pred_region
              _
            $region47: #{fused_conv_mish_bn.1} parent=31 // pred_fallthru
              _
          $region32: #{fused_conv_mish_bn.1} parent=27 // pred_fallthru
            _
          %172 = vnop
        $region28: #{fused_conv_mish_bn.1} parent=23 // pred_fallthru
          _
      $region24: #{fused_conv_mish_bn.1} parent=5 // pred_fallthru
        _
      %p173 = scmp.le.s32.totalorder 1, %s9
      %p174 = scmp.lt.s32.totalorder %s9, 3
      %p175 = pnand %p173, %p174
      %p176 = pneg %p175
      // Predicated region
      $region48: #{fused_conv_mish_bn.1} parent=5 // pred_check
        _
      $region49: #{fused_conv_mish_bn.1} parent=5 // pred_check_branch
        %178 = sbr.rel (%p175) target = $region51
      $region50: #{fused_conv_mish_bn.1} parent=5 // pred_region
        %s179 = ssub.s32 %s9, 1
        %s180 = sand.u32 %s22, 1
        %s181 = sand.u32 %s22, 1
        %s182 = smul.addr %s181, 80
        %s183 = scalar_lea.vmem [#allocation2], %s182
        // Predicated region
        $region52: #{fused_conv_mish_bn.1} parent=50 // pred_check
          %p184 = pneg %p35
        $region53: #{fused_conv_mish_bn.1} parent=50 // pred_check_branch
          %186 = sbr.rel (%p184) target = $region55
        $region54: #{fused_conv_mish_bn.1} parent=50 // pred_region
          _
        $region55: #{fused_conv_mish_bn.1} parent=50 // pred_fallthru
          _
        %s187 = sand.u32 %s22, 1
        %s188 = sand.u32 %s22, 1
        %s189 = smul.addr %s188, 80
        %s190 = scalar_lea.vmem [#allocation2], %s189
        %p191 = pneg %p35
        %p192 = pneg %p32
        %p193 = pneg %p56
        %p194 = pneg %p53
        %p195 = pneg %p77
        %p196 = pneg %p74
        %p197 = pneg %p103
        %p198 = pneg %p100
        %s199 = sand.u32 %s90, 1
        %s200 = sand.u32 %s90, 1
        %s201 = smul.addr %s200, 32
        %s202 = scalar_lea.vmem [#allocation3], %s201
        %s203 = smul.u32 2, %s14
        %s204 = smul.u32 2, %s14
        %v205 = vld [vmem:[%s1] sm:$0xff]
        %v206 = vld [vmem:[%s1 + $0x8] sm:$0xff]
        %v207 = vld [vmem:[%s183] sm:$0xff]
        %v208 = vld [vmem:[%s183 + $0x8] sm:$0xff]
        %v209 = vld [vmem:[%s183 + $0x10] sm:$0xff]
        %v210 = vld [vmem:[%s183 + $0x18] sm:$0xff]
        %v211 = vld [vmem:[%s183 + $0x20] sm:$0xff]
        %v212 = vld [vmem:[%s183 + $0x28] sm:$0xff]
        %v213 = vld [vmem:[%s183 + $0x30] sm:$0xff]
        %v214 = vld [vmem:[%s183 + $0x38] sm:$0xff]
        %v215 = vld [vmem:[%s183 + $0x40] sm:$0xff]
        %v216 = vld [vmem:[%s183 + $0x48] sm:$0xff]
        %vm217 = vcmask 326656
        %v219 = vsel %vm217, %v205, 0
        %v222 = vsel %vm217, %v206, 0
        %224 = vmatprep.subr.mxu0 0.0
        %225 = vmatpush1.msra.mxu0 0.0
        %226 = vmatprep.subr.mxu0 0.0
        %227 = vmatpush1.msra.mxu0 0.0
        %228 = vmatprep.subr.mxu0 0.0
        %229 = vmatpush1.msra.mxu0 0.0
        %230 = vmatprep.subr.mxu0 0.0
        %231 = vmatpush1.msra.mxu0 0.0
        %232 = vmatprep.subr.mxu0 0.0
        %233 = vmatpush1.msra.mxu0 0.0
        %234 = vmatprep.subr.mxu0 0.0
        %235 = vmatpush1.msra.mxu0 0.0
        %236 = vmatprep.subr.mxu0 0.0
        %237 = vmatpush1.msra.mxu0 0.0
        %238 = vmatprep.subr.mxu0 0.0
        %239 = vmatpush1.msra.mxu0 0.0
        %240 = vmatprep.subr.mxu0 0.0
        %241 = vmatpush1.msra.mxu0 0.0
        %242 = vmatprep.subr.mxu0 0.0
        %243 = vmatpush1.msra.mxu0 0.0
        %244 = vmatprep.subr.mxu0 0.0
        %245 = vmatpush1.msra.mxu0 0.0
        %v246 = vand.u32 %v216, 4294901760
        %247 = vmatprep.subr.mxu0 %v246
        %v248 = vand.u32 %v215, 4294901760
        %249 = vmatpush1.msra.mxu0 %v248
        %v250 = vand.u32 %v214, 4294901760
        %251 = vmatprep.subr.mxu0 %v250
        %v252 = vand.u32 %v213, 4294901760
        %253 = vmatpush1.msra.mxu0 %v252
        %v254 = vand.u32 %v212, 4294901760
        %255 = vmatprep.subr.mxu0 %v254
        %v256 = vand.u32 %v211, 4294901760
        %257 = vmatpush1.msra.mxu0 %v256
        %v258 = vand.u32 %v210, 4294901760
        %259 = vmatprep.subr.mxu0 %v258
        %v260 = vand.u32 %v209, 4294901760
        %261 = vmatpush1.msra.mxu0 %v260
        %v262 = vand.u32 %v208, 4294901760
        %263 = vmatprep.subr.mxu0 %v262
        %v264 = vand.u32 %v207, 4294901760
        %265 = vmatpush1.msra.mxu0 %v264
        %266 = vmatprep.subr.mxu0 0.0
        %267 = vmatpush2.msra.mxu0 0.0
        %268 = vmatprep.subr.mxu0 0.0
        %269 = vmatpush2.msra.mxu0 0.0
        %270 = vmatprep.subr.mxu0 0.0
        %271 = vmatpush2.msra.mxu0 0.0
        %272 = vmatprep.subr.mxu0 0.0
        %273 = vmatpush2.msra.mxu0 0.0
        %274 = vmatprep.subr.mxu0 0.0
        %275 = vmatpush2.msra.mxu0 0.0
        %276 = vmatprep.subr.mxu0 0.0
        %277 = vmatpush2.msra.mxu0 0.0
        %278 = vmatprep.subr.mxu0 0.0
        %279 = vmatpush2.msra.mxu0 0.0
        %280 = vmatprep.subr.mxu0 0.0
        %281 = vmatpush2.msra.mxu0 0.0
        %282 = vmatprep.subr.mxu0 0.0
        %283 = vmatpush2.msra.mxu0 0.0
        %284 = vmatprep.subr.mxu0 0.0
        %285 = vmatpush2.msra.mxu0 0.0
        %286 = vmatprep.subr.mxu0 0.0
        %287 = vmatpush2.msra.mxu0 0.0
        %288 = vmatprep.subr.mxu0 0.0
        %289 = vmatpush2.msra.mxu0 0.0
        %290 = vmatprep.subr.mxu0 0.0
        %291 = vmatpush2.msra.mxu0 0.0
        %292 = vmatprep.subr.mxu0 0.0
        %293 = vmatpush2.msra.mxu0 0.0
        %294 = vmatprep.subr.mxu0 0.0
        %295 = vmatpush2.msra.mxu0 0.0
        %296 = vmatprep.subr.mxu0 0.0
        %297 = vmatpush2.msra.mxu0 0.0
        %298 = vmatprep.mubr.f32.mxu0 0.0
        %v299 = vand.u32 %v219, 4294901760
        %v300 = vsub.f32 %v219, %v299
        %v301 = vand.u32 %v300, 4294901760
        %v302 = vsub.f32 %v300, %v301
        %v303 = vand.u32 %v302, 4294901760
        %304 = vmatmul.mubr.f32.gmra.mxu0 %v303
        %v305 = vpop.f32.mrf.mxu0
        %v306 = vadd.f32 0.0, %v305
        %v307 = vpop.f32.mrf.mxu0
        %v308 = vadd.f32 0.0, %v307
        %309 = vmatprep.mubr.f32.mxu0 0.0
        %v310 = vand.u32 %v222, 4294901760
        %v311 = vsub.f32 %v222, %v310
        %v312 = vand.u32 %v311, 4294901760
        %v313 = vsub.f32 %v311, %v312
        %v314 = vand.u32 %v313, 4294901760
        %315 = vmatmul.mubr.f32.gmra.mxu0 %v314
        %v316 = vpop.f32.mrf.mxu0
        %v317 = vadd.f32 0.0, %v316
        %v318 = vpop.f32.mrf.mxu0
        %v319 = vadd.f32 0.0, %v318
        %320 = vdwg.mxu0
        %321 = vmatprep.subr.mxu0 0.0
        %322 = vmatpush1.msra.mxu0 0.0
        %323 = vmatprep.subr.mxu0 0.0
        %324 = vmatpush1.msra.mxu0 0.0
        %325 = vmatprep.subr.mxu0 0.0
        %326 = vmatpush1.msra.mxu0 0.0
        %327 = vmatprep.subr.mxu0 0.0
        %328 = vmatpush1.msra.mxu0 0.0
        %329 = vmatprep.subr.mxu0 0.0
        %330 = vmatpush1.msra.mxu0 0.0
        %331 = vmatprep.subr.mxu0 0.0
        %332 = vmatpush1.msra.mxu0 0.0
        %333 = vmatprep.subr.mxu0 0.0
        %334 = vmatpush1.msra.mxu0 0.0
        %335 = vmatprep.subr.mxu0 0.0
        %336 = vmatpush1.msra.mxu0 0.0
        %337 = vmatprep.subr.mxu0 0.0
        %338 = vmatpush1.msra.mxu0 0.0
        %339 = vmatprep.subr.mxu0 0.0
        %340 = vmatpush1.msra.mxu0 0.0
        %341 = vmatprep.subr.mxu0 0.0
        %342 = vmatpush1.msra.mxu0 0.0
        %v343 = vand.u32 %v216, 4294901760
        %v344 = vsub.f32 %v216, %v343
        %v345 = vand.u32 %v344, 4294901760
        %v346 = vsub.f32 %v344, %v345
        %v347 = vand.u32 %v346, 4294901760
        %348 = vmatprep.subr.mxu0 %v347
        %v349 = vand.u32 %v215, 4294901760
        %v350 = vsub.f32 %v215, %v349
        %v351 = vand.u32 %v350, 4294901760
        %v352 = vsub.f32 %v350, %v351
        %v353 = vand.u32 %v352, 4294901760
        %354 = vmatpush1.msra.mxu0 %v353
        %v355 = vand.u32 %v214, 4294901760
        %v356 = vsub.f32 %v214, %v355
        %v357 = vand.u32 %v356, 4294901760
        %v358 = vsub.f32 %v356, %v357
        %v359 = vand.u32 %v358, 4294901760
        %360 = vmatprep.subr.mxu0 %v359
        %v361 = vand.u32 %v213, 4294901760
        %v362 = vsub.f32 %v213, %v361
        %v363 = vand.u32 %v362, 4294901760
        %v364 = vsub.f32 %v362, %v363
        %v365 = vand.u32 %v364, 4294901760
        %366 = vmatpush1.msra.mxu0 %v365
        %v367 = vand.u32 %v212, 4294901760
        %v368 = vsub.f32 %v212, %v367
        %v369 = vand.u32 %v368, 4294901760
        %v370 = vsub.f32 %v368, %v369
        %v371 = vand.u32 %v370, 4294901760
        %372 = vmatprep.subr.mxu0 %v371
        %v373 = vand.u32 %v211, 4294901760
        %v374 = vsub.f32 %v211, %v373
        %v375 = vand.u32 %v374, 4294901760
        %v376 = vsub.f32 %v374, %v375
        %v377 = vand.u32 %v376, 4294901760
        %378 = vmatpush1.msra.mxu0 %v377
        %v379 = vand.u32 %v210, 4294901760
        %v380 = vsub.f32 %v210, %v379
        %v381 = vand.u32 %v380, 4294901760
        %v382 = vsub.f32 %v380, %v381
        %v383 = vand.u32 %v382, 4294901760
        %384 = vmatprep.subr.mxu0 %v383
        %v385 = vand.u32 %v209, 4294901760
        %v386 = vsub.f32 %v209, %v385
        %v387 = vand.u32 %v386, 4294901760
        %v388 = vsub.f32 %v386, %v387
        %v389 = vand.u32 %v388, 4294901760
        %390 = vmatpush1.msra.mxu0 %v389
        %v391 = vand.u32 %v208, 4294901760
        %v392 = vsub.f32 %v208, %v391
        %v393 = vand.u32 %v392, 4294901760
        %v394 = vsub.f32 %v392, %v393
        %v395 = vand.u32 %v394, 4294901760
        %396 = vmatprep.subr.mxu0 %v395
        %v397 = vand.u32 %v207, 4294901760
        %v398 = vsub.f32 %v207, %v397
        %v399 = vand.u32 %v398, 4294901760
        %v400 = vsub.f32 %v398, %v399
        %v401 = vand.u32 %v400, 4294901760
        %402 = vmatpush1.msra.mxu0 %v401
        %403 = vmatprep.subr.mxu0 0.0
        %404 = vmatpush2.msra.mxu0 0.0
        %405 = vmatprep.subr.mxu0 0.0
        %406 = vmatpush2.msra.mxu0 0.0
        %407 = vmatprep.subr.mxu0 0.0
        %408 = vmatpush2.msra.mxu0 0.0
        %409 = vmatprep.subr.mxu0 0.0
        %410 = vmatpush2.msra.mxu0 0.0
        %411 = vmatprep.subr.mxu0 0.0
        %412 = vmatpush2.msra.mxu0 0.0
        %413 = vmatprep.subr.mxu0 0.0
        %414 = vmatpush2.msra.mxu0 0.0
        %415 = vmatprep.subr.mxu0 0.0
        %416 = vmatpush2.msra.mxu0 0.0
        %417 = vmatprep.subr.mxu0 0.0
        %418 = vmatpush2.msra.mxu0 0.0
        %419 = vmatprep.subr.mxu0 0.0
        %420 = vmatpush2.msra.mxu0 0.0
        %421 = vmatprep.subr.mxu0 0.0
        %422 = vmatpush2.msra.mxu0 0.0
        %423 = vmatprep.subr.mxu0 0.0
        %424 = vmatpush2.msra.mxu0 0.0
        %425 = vmatprep.subr.mxu0 0.0
        %426 = vmatpush2.msra.mxu0 0.0
        %427 = vmatprep.subr.mxu0 0.0
        %428 = vmatpush2.msra.mxu0 0.0
        %429 = vmatprep.subr.mxu0 0.0
        %430 = vmatpush2.msra.mxu0 0.0
        %431 = vmatprep.subr.mxu0 0.0
        %432 = vmatpush2.msra.mxu0 0.0
        %433 = vmatprep.subr.mxu0 0.0
        %434 = vmatpush2.msra.mxu0 0.0
        %435 = vmatprep.mubr.f32.mxu0 0.0
        %v436 = vand.u32 %v219, 4294901760
        %437 = vmatmul.mubr.f32.gmra.mxu0 %v436
        %v438 = vpop.f32.mrf.mxu0
        %v439 = vadd.f32 %v306, %v438
        %v440 = vpop.f32.mrf.mxu0
        %v441 = vadd.f32 %v308, %v440
        %442 = vmatprep.mubr.f32.mxu0 0.0
        %v443 = vand.u32 %v222, 4294901760
        %444 = vmatmul.mubr.f32.gmra.mxu0 %v443
        %v445 = vpop.f32.mrf.mxu0
        %v446 = vadd.f32 %v317, %v445
        %v447 = vpop.f32.mrf.mxu0
        %v448 = vadd.f32 %v319, %v447
        %449 = vdwg.mxu0
        %450 = vmatprep.subr.mxu0 0.0
        %451 = vmatpush1.msra.mxu0 0.0
        %452 = vmatprep.subr.mxu0 0.0
        %453 = vmatpush1.msra.mxu0 0.0
        %454 = vmatprep.subr.mxu0 0.0
        %455 = vmatpush1.msra.mxu0 0.0
        %456 = vmatprep.subr.mxu0 0.0
        %457 = vmatpush1.msra.mxu0 0.0
        %458 = vmatprep.subr.mxu0 0.0
        %459 = vmatpush1.msra.mxu0 0.0
        %460 = vmatprep.subr.mxu0 0.0
        %461 = vmatpush1.msra.mxu0 0.0
        %462 = vmatprep.subr.mxu0 0.0
        %463 = vmatpush1.msra.mxu0 0.0
        %464 = vmatprep.subr.mxu0 0.0
        %465 = vmatpush1.msra.mxu0 0.0
        %466 = vmatprep.subr.mxu0 0.0
        %467 = vmatpush1.msra.mxu0 0.0
        %468 = vmatprep.subr.mxu0 0.0
        %469 = vmatpush1.msra.mxu0 0.0
        %470 = vmatprep.subr.mxu0 0.0
        %471 = vmatpush1.msra.mxu0 0.0
        %v472 = vand.u32 %v216, 4294901760
        %v473 = vsub.f32 %v216, %v472
        %474 = vmatprep.subr.mxu0 %v473
        %v475 = vand.u32 %v215, 4294901760
        %v476 = vsub.f32 %v215, %v475
        %477 = vmatpush1.msra.mxu0 %v476
        %v478 = vand.u32 %v214, 4294901760
        %v479 = vsub.f32 %v214, %v478
        %480 = vmatprep.subr.mxu0 %v479
        %v481 = vand.u32 %v213, 4294901760
        %v482 = vsub.f32 %v213, %v481
        %483 = vmatpush1.msra.mxu0 %v482
        %v484 = vand.u32 %v212, 4294901760
        %v485 = vsub.f32 %v212, %v484
        %486 = vmatprep.subr.mxu0 %v485
        %v487 = vand.u32 %v211, 4294901760
        %v488 = vsub.f32 %v211, %v487
        %489 = vmatpush1.msra.mxu0 %v488
        %v490 = vand.u32 %v210, 4294901760
        %v491 = vsub.f32 %v210, %v490
        %492 = vmatprep.subr.mxu0 %v491
        %v493 = vand.u32 %v209, 4294901760
        %v494 = vsub.f32 %v209, %v493
        %495 = vmatpush1.msra.mxu0 %v494
        %v496 = vand.u32 %v208, 4294901760
        %v497 = vsub.f32 %v208, %v496
        %498 = vmatprep.subr.mxu0 %v497
        %v499 = vand.u32 %v207, 4294901760
        %v500 = vsub.f32 %v207, %v499
        %501 = vmatpush1.msra.mxu0 %v500
        %502 = vmatprep.subr.mxu0 0.0
        %503 = vmatpush2.msra.mxu0 0.0
        %504 = vmatprep.subr.mxu0 0.0
        %505 = vmatpush2.msra.mxu0 0.0
        %506 = vmatprep.subr.mxu0 0.0
        %507 = vmatpush2.msra.mxu0 0.0
        %508 = vmatprep.subr.mxu0 0.0
        %509 = vmatpush2.msra.mxu0 0.0
        %510 = vmatprep.subr.mxu0 0.0
        %511 = vmatpush2.msra.mxu0 0.0
        %512 = vmatprep.subr.mxu0 0.0
        %513 = vmatpush2.msra.mxu0 0.0
        %514 = vmatprep.subr.mxu0 0.0
        %515 = vmatpush2.msra.mxu0 0.0
        %516 = vmatprep.subr.mxu0 0.0
        %517 = vmatpush2.msra.mxu0 0.0
        %518 = vmatprep.subr.mxu0 0.0
        %519 = vmatpush2.msra.mxu0 0.0
        %520 = vmatprep.subr.mxu0 0.0
        %521 = vmatpush2.msra.mxu0 0.0
        %522 = vmatprep.subr.mxu0 0.0
        %523 = vmatpush2.msra.mxu0 0.0
        %524 = vmatprep.subr.mxu0 0.0
        %525 = vmatpush2.msra.mxu0 0.0
        %526 = vmatprep.subr.mxu0 0.0
        %527 = vmatpush2.msra.mxu0 0.0
        %528 = vmatprep.subr.mxu0 0.0
        %529 = vmatpush2.msra.mxu0 0.0
        %530 = vmatprep.subr.mxu0 0.0
        %531 = vmatpush2.msra.mxu0 0.0
        %532 = vmatprep.subr.mxu0 0.0
        %533 = vmatpush2.msra.mxu0 0.0
        %534 = vmatprep.mubr.f32.mxu0 0.0
        %v535 = vand.u32 %v219, 4294901760
        %v536 = vsub.f32 %v219, %v535
        %537 = vmatmul.mubr.f32.gmra.mxu0 %v536
        %v538 = vpop.f32.mrf.mxu0
        %v539 = vadd.f32 %v439, %v538
        %v540 = vpop.f32.mrf.mxu0
        %v541 = vadd.f32 %v441, %v540
        %542 = vmatprep.mubr.f32.mxu0 0.0
        %v543 = vand.u32 %v222, 4294901760
        %v544 = vsub.f32 %v222, %v543
        %545 = vmatmul.mubr.f32.gmra.mxu0 %v544
        %v546 = vpop.f32.mrf.mxu0
        %v547 = vadd.f32 %v446, %v546
        %v548 = vpop.f32.mrf.mxu0
        %v549 = vadd.f32 %v448, %v548
        %550 = vdwg.mxu0
        %551 = vmatprep.subr.mxu0 0.0
        %552 = vmatpush1.msra.mxu0 0.0
        %553 = vmatprep.subr.mxu0 0.0
        %554 = vmatpush1.msra.mxu0 0.0
        %555 = vmatprep.subr.mxu0 0.0
        %556 = vmatpush1.msra.mxu0 0.0
        %557 = vmatprep.subr.mxu0 0.0
        %558 = vmatpush1.msra.mxu0 0.0
        %559 = vmatprep.subr.mxu0 0.0
        %560 = vmatpush1.msra.mxu0 0.0
        %561 = vmatprep.subr.mxu0 0.0
        %562 = vmatpush1.msra.mxu0 0.0
        %563 = vmatprep.subr.mxu0 0.0
        %564 = vmatpush1.msra.mxu0 0.0
        %565 = vmatprep.subr.mxu0 0.0
        %566 = vmatpush1.msra.mxu0 0.0
        %567 = vmatprep.subr.mxu0 0.0
        %568 = vmatpush1.msra.mxu0 0.0
        %569 = vmatprep.subr.mxu0 0.0
        %570 = vmatpush1.msra.mxu0 0.0
        %571 = vmatprep.subr.mxu0 0.0
        %572 = vmatpush1.msra.mxu0 0.0
        %v573 = vand.u32 %v216, 4294901760
        %574 = vmatprep.subr.mxu0 %v573
        %v575 = vand.u32 %v215, 4294901760
        %576 = vmatpush1.msra.mxu0 %v575
        %v577 = vand.u32 %v214, 4294901760
        %578 = vmatprep.subr.mxu0 %v577
        %v579 = vand.u32 %v213, 4294901760
        %580 = vmatpush1.msra.mxu0 %v579
        %v581 = vand.u32 %v212, 4294901760
        %582 = vmatprep.subr.mxu0 %v581
        %v583 = vand.u32 %v211, 4294901760
        %584 = vmatpush1.msra.mxu0 %v583
        %v585 = vand.u32 %v210, 4294901760
        %586 = vmatprep.subr.mxu0 %v585
        %v587 = vand.u32 %v209, 4294901760
        %588 = vmatpush1.msra.mxu0 %v587
        %v589 = vand.u32 %v208, 4294901760
        %590 = vmatprep.subr.mxu0 %v589
        %v591 = vand.u32 %v207, 4294901760
        %592 = vmatpush1.msra.mxu0 %v591
        %593 = vmatprep.subr.mxu0 0.0
        %594 = vmatpush2.msra.mxu0 0.0
        %595 = vmatprep.subr.mxu0 0.0
        %596 = vmatpush2.msra.mxu0 0.0
        %597 = vmatprep.subr.mxu0 0.0
        %598 = vmatpush2.msra.mxu0 0.0
        %599 = vmatprep.subr.mxu0 0.0
        %600 = vmatpush2.msra.mxu0 0.0
        %601 = vmatprep.subr.mxu0 0.0
        %602 = vmatpush2.msra.mxu0 0.0
        %603 = vmatprep.subr.mxu0 0.0
        %604 = vmatpush2.msra.mxu0 0.0
        %605 = vmatprep.subr.mxu0 0.0
        %606 = vmatpush2.msra.mxu0 0.0
        %607 = vmatprep.subr.mxu0 0.0
        %608 = vmatpush2.msra.mxu0 0.0
        %609 = vmatprep.subr.mxu0 0.0
        %610 = vmatpush2.msra.mxu0 0.0
        %611 = vmatprep.subr.mxu0 0.0
        %612 = vmatpush2.msra.mxu0 0.0
        %613 = vmatprep.subr.mxu0 0.0
        %614 = vmatpush2.msra.mxu0 0.0
        %615 = vmatprep.subr.mxu0 0.0
        %616 = vmatpush2.msra.mxu0 0.0
        %617 = vmatprep.subr.mxu0 0.0
        %618 = vmatpush2.msra.mxu0 0.0
        %619 = vmatprep.subr.mxu0 0.0
        %620 = vmatpush2.msra.mxu0 0.0
        %621 = vmatprep.subr.mxu0 0.0
        %622 = vmatpush2.msra.mxu0 0.0
        %623 = vmatprep.subr.mxu0 0.0
        %624 = vmatpush2.msra.mxu0 0.0
        %625 = vmatprep.mubr.f32.mxu0 0.0
        %v626 = vand.u32 %v219, 4294901760
        %v627 = vsub.f32 %v219, %v626
        %v628 = vand.u32 %v627, 4294901760
        %629 = vmatmul.mubr.f32.gmra.mxu0 %v628
        %v630 = vpop.f32.mrf.mxu0
        %v631 = vadd.f32 %v539, %v630
        %v632 = vpop.f32.mrf.mxu0
        %v633 = vadd.f32 %v541, %v632
        %634 = vmatprep.mubr.f32.mxu0 0.0
        %v635 = vand.u32 %v222, 4294901760
        %v636 = vsub.f32 %v222, %v635
        %v637 = vand.u32 %v636, 4294901760
        %638 = vmatmul.mubr.f32.gmra.mxu0 %v637
        %v639 = vpop.f32.mrf.mxu0
        %v640 = vadd.f32 %v547, %v639
        %v641 = vpop.f32.mrf.mxu0
        %v642 = vadd.f32 %v549, %v641
        %643 = vdwg.mxu0
        %644 = vmatprep.subr.mxu0 0.0
        %645 = vmatpush1.msra.mxu0 0.0
        %646 = vmatprep.subr.mxu0 0.0
        %647 = vmatpush1.msra.mxu0 0.0
        %648 = vmatprep.subr.mxu0 0.0
        %649 = vmatpush1.msra.mxu0 0.0
        %650 = vmatprep.subr.mxu0 0.0
        %651 = vmatpush1.msra.mxu0 0.0
        %652 = vmatprep.subr.mxu0 0.0
        %653 = vmatpush1.msra.mxu0 0.0
        %654 = vmatprep.subr.mxu0 0.0
        %655 = vmatpush1.msra.mxu0 0.0
        %656 = vmatprep.subr.mxu0 0.0
        %657 = vmatpush1.msra.mxu0 0.0
        %658 = vmatprep.subr.mxu0 0.0
        %659 = vmatpush1.msra.mxu0 0.0
        %660 = vmatprep.subr.mxu0 0.0
        %661 = vmatpush1.msra.mxu0 0.0
        %662 = vmatprep.subr.mxu0 0.0
        %663 = vmatpush1.msra.mxu0 0.0
        %664 = vmatprep.subr.mxu0 0.0
        %665 = vmatpush1.msra.mxu0 0.0
        %v666 = vand.u32 %v216, 4294901760
        %v667 = vsub.f32 %v216, %v666
        %v668 = vand.u32 %v667, 4294901760
        %669 = vmatprep.subr.mxu0 %v668
        %v670 = vand.u32 %v215, 4294901760
        %v671 = vsub.f32 %v215, %v670
        %v672 = vand.u32 %v671, 4294901760
        %673 = vmatpush1.msra.mxu0 %v672
        %v674 = vand.u32 %v214, 4294901760
        %v675 = vsub.f32 %v214, %v674
        %v676 = vand.u32 %v675, 4294901760
        %677 = vmatprep.subr.mxu0 %v676
        %v678 = vand.u32 %v213, 4294901760
        %v679 = vsub.f32 %v213, %v678
        %v680 = vand.u32 %v679, 4294901760
        %681 = vmatpush1.msra.mxu0 %v680
        %v682 = vand.u32 %v212, 4294901760
        %v683 = vsub.f32 %v212, %v682
        %v684 = vand.u32 %v683, 4294901760
        %685 = vmatprep.subr.mxu0 %v684
        %v686 = vand.u32 %v211, 4294901760
        %v687 = vsub.f32 %v211, %v686
        %v688 = vand.u32 %v687, 4294901760
        %689 = vmatpush1.msra.mxu0 %v688
        %v690 = vand.u32 %v210, 4294901760
        %v691 = vsub.f32 %v210, %v690
        %v692 = vand.u32 %v691, 4294901760
        %693 = vmatprep.subr.mxu0 %v692
        %v694 = vand.u32 %v209, 4294901760
        %v695 = vsub.f32 %v209, %v694
        %v696 = vand.u32 %v695, 4294901760
        %697 = vmatpush1.msra.mxu0 %v696
        %v698 = vand.u32 %v208, 4294901760
        %v699 = vsub.f32 %v208, %v698
        %v700 = vand.u32 %v699, 4294901760
        %701 = vmatprep.subr.mxu0 %v700
        %v702 = vand.u32 %v207, 4294901760
        %v703 = vsub.f32 %v207, %v702
        %v704 = vand.u32 %v703, 4294901760
        %705 = vmatpush1.msra.mxu0 %v704
        %706 = vmatprep.subr.mxu0 0.0
        %707 = vmatpush2.msra.mxu0 0.0
        %708 = vmatprep.subr.mxu0 0.0
        %709 = vmatpush2.msra.mxu0 0.0
        %710 = vmatprep.subr.mxu0 0.0
        %711 = vmatpush2.msra.mxu0 0.0
        %712 = vmatprep.subr.mxu0 0.0
        %713 = vmatpush2.msra.mxu0 0.0
        %714 = vmatprep.subr.mxu0 0.0
        %715 = vmatpush2.msra.mxu0 0.0
        %716 = vmatprep.subr.mxu0 0.0
        %717 = vmatpush2.msra.mxu0 0.0
        %718 = vmatprep.subr.mxu0 0.0
        %719 = vmatpush2.msra.mxu0 0.0
        %720 = vmatprep.subr.mxu0 0.0
        %721 = vmatpush2.msra.mxu0 0.0
        %722 = vmatprep.subr.mxu0 0.0
        %723 = vmatpush2.msra.mxu0 0.0
        %724 = vmatprep.subr.mxu0 0.0
        %725 = vmatpush2.msra.mxu0 0.0
        %726 = vmatprep.subr.mxu0 0.0
        %727 = vmatpush2.msra.mxu0 0.0
        %728 = vmatprep.subr.mxu0 0.0
        %729 = vmatpush2.msra.mxu0 0.0
        %730 = vmatprep.subr.mxu0 0.0
        %731 = vmatpush2.msra.mxu0 0.0
        %732 = vmatprep.subr.mxu0 0.0
        %733 = vmatpush2.msra.mxu0 0.0
        %734 = vmatprep.subr.mxu0 0.0
        %735 = vmatpush2.msra.mxu0 0.0
        %736 = vmatprep.subr.mxu0 0.0
        %737 = vmatpush2.msra.mxu0 0.0
        %738 = vmatprep.mubr.f32.mxu0 0.0
        %v739 = vand.u32 %v219, 4294901760
        %740 = vmatmul.mubr.f32.gmra.mxu0 %v739
        %v741 = vpop.f32.mrf.mxu0
        %v742 = vadd.f32 %v631, %v741
        %v743 = vpop.f32.mrf.mxu0
        %v744 = vadd.f32 %v633, %v743
        %745 = vmatprep.mubr.f32.mxu0 0.0
        %v746 = vand.u32 %v222, 4294901760
        %747 = vmatmul.mubr.f32.gmra.mxu0 %v746
        %v748 = vpop.f32.mrf.mxu0
        %v749 = vadd.f32 %v640, %v748
        %v750 = vpop.f32.mrf.mxu0
        %v751 = vadd.f32 %v642, %v750
        %752 = vdwg.mxu0
        %753 = vmatprep.subr.mxu0 0.0
        %754 = vmatpush1.msra.mxu0 0.0
        %755 = vmatprep.subr.mxu0 0.0
        %756 = vmatpush1.msra.mxu0 0.0
        %757 = vmatprep.subr.mxu0 0.0
        %758 = vmatpush1.msra.mxu0 0.0
        %759 = vmatprep.subr.mxu0 0.0
        %760 = vmatpush1.msra.mxu0 0.0
        %761 = vmatprep.subr.mxu0 0.0
        %762 = vmatpush1.msra.mxu0 0.0
        %763 = vmatprep.subr.mxu0 0.0
        %764 = vmatpush1.msra.mxu0 0.0
        %765 = vmatprep.subr.mxu0 0.0
        %766 = vmatpush1.msra.mxu0 0.0
        %767 = vmatprep.subr.mxu0 0.0
        %768 = vmatpush1.msra.mxu0 0.0
        %769 = vmatprep.subr.mxu0 0.0
        %770 = vmatpush1.msra.mxu0 0.0
        %771 = vmatprep.subr.mxu0 0.0
        %772 = vmatpush1.msra.mxu0 0.0
        %773 = vmatprep.subr.mxu0 0.0
        %774 = vmatpush1.msra.mxu0 0.0
        %v775 = vand.u32 %v216, 4294901760
        %776 = vmatprep.subr.mxu0 %v775
        %v777 = vand.u32 %v215, 4294901760
        %778 = vmatpush1.msra.mxu0 %v777
        %v779 = vand.u32 %v214, 4294901760
        %780 = vmatprep.subr.mxu0 %v779
        %v781 = vand.u32 %v213, 4294901760
        %782 = vmatpush1.msra.mxu0 %v781
        %v783 = vand.u32 %v212, 4294901760
        %784 = vmatprep.subr.mxu0 %v783
        %v785 = vand.u32 %v211, 4294901760
        %786 = vmatpush1.msra.mxu0 %v785
        %v787 = vand.u32 %v210, 4294901760
        %788 = vmatprep.subr.mxu0 %v787
        %v789 = vand.u32 %v209, 4294901760
        %790 = vmatpush1.msra.mxu0 %v789
        %v791 = vand.u32 %v208, 4294901760
        %792 = vmatprep.subr.mxu0 %v791
        %v793 = vand.u32 %v207, 4294901760
        %794 = vmatpush1.msra.mxu0 %v793
        %795 = vmatprep.subr.mxu0 0.0
        %796 = vmatpush2.msra.mxu0 0.0
        %797 = vmatprep.subr.mxu0 0.0
        %798 = vmatpush2.msra.mxu0 0.0
        %799 = vmatprep.subr.mxu0 0.0
        %800 = vmatpush2.msra.mxu0 0.0
        %801 = vmatprep.subr.mxu0 0.0
        %802 = vmatpush2.msra.mxu0 0.0
        %803 = vmatprep.subr.mxu0 0.0
        %804 = vmatpush2.msra.mxu0 0.0
        %805 = vmatprep.subr.mxu0 0.0
        %806 = vmatpush2.msra.mxu0 0.0
        %807 = vmatprep.subr.mxu0 0.0
        %808 = vmatpush2.msra.mxu0 0.0
        %809 = vmatprep.subr.mxu0 0.0
        %810 = vmatpush2.msra.mxu0 0.0
        %811 = vmatprep.subr.mxu0 0.0
        %812 = vmatpush2.msra.mxu0 0.0
        %813 = vmatprep.subr.mxu0 0.0
        %814 = vmatpush2.msra.mxu0 0.0
        %815 = vmatprep.subr.mxu0 0.0
        %816 = vmatpush2.msra.mxu0 0.0
        %817 = vmatprep.subr.mxu0 0.0
        %818 = vmatpush2.msra.mxu0 0.0
        %819 = vmatprep.subr.mxu0 0.0
        %820 = vmatpush2.msra.mxu0 0.0
        %821 = vmatprep.subr.mxu0 0.0
        %822 = vmatpush2.msra.mxu0 0.0
        %823 = vmatprep.subr.mxu0 0.0
        %824 = vmatpush2.msra.mxu0 0.0
        %825 = vmatprep.subr.mxu0 0.0
        %826 = vmatpush2.msra.mxu0 0.0
        %827 = vmatprep.mubr.f32.mxu0 0.0
        %v828 = vand.u32 %v219, 4294901760
        %829 = vmatmul.mubr.f32.gmra.mxu0 %v828
        %v830 = vpop.f32.mrf.mxu0
        %v831 = vadd.f32 %v742, %v830
        %v832 = vpop.f32.mrf.mxu0
        %v833 = vadd.f32 %v744, %v832
        %834 = vmatprep.mubr.f32.mxu0 0.0
        %v835 = vand.u32 %v222, 4294901760
        %836 = vmatmul.mubr.f32.gmra.mxu0 %v835
        %v837 = vpop.f32.mrf.mxu0
        %v838 = vadd.f32 %v749, %v837
        %v839 = vpop.f32.mrf.mxu0
        %v840 = vadd.f32 %v751, %v839
        %841 = vdwg.mxu0
        %v842 = vmin.f32 %v831, 20.0
        %v843 = vmin.f32 %v833, 20.0
        %v844 = vmin.f32 %v838, 20.0
        %v845 = vmin.f32 %v840, 20.0
        %v846 = vmul.f32 %v842, 1.442695
        %v847 = vpow.pop %v846
        %v848 = vmul.f32 %v843, 1.442695
        %v849 = vpow.pop %v848
        %v850 = vmul.f32 %v844, 1.442695
        %v851 = vpow.pop %v850
        %v852 = vmul.f32 %v845, 1.442695
        %v853 = vpow.pop %v852
        %v854 = vadd.f32 %v847, 2.0
        %v855 = vadd.f32 %v849, 2.0
        %v856 = vadd.f32 %v851, 2.0
        %v857 = vadd.f32 %v853, 2.0
        %v858 = vmul.f32 %v847, %v854
        %v859 = vmul.f32 %v849, %v855
        %v860 = vmul.f32 %v851, %v856
        %v861 = vmul.f32 %v853, %v857
        %v862 = vadd.f32 %v858, 2.0
        %v863 = vadd.f32 %v859, 2.0
        %v864 = vadd.f32 %v860, 2.0
        %v865 = vadd.f32 %v861, 2.0
        %v866 = vrcp.pop %v862
        %v867 = vrcp.pop %v863
        %v868 = vrcp.pop %v864
        %v869 = vrcp.pop %v865
        %v870 = vmul.f32 %v862, %v866
        %v871 = vmul.f32 %v863, %v867
        %v872 = vmul.f32 %v864, %v868
        %v873 = vmul.f32 %v865, %v869
        %v874 = vsub.f32 2.0, %v870
        %v875 = vsub.f32 2.0, %v871
        %v876 = vsub.f32 2.0, %v872
        %v877 = vsub.f32 2.0, %v873
        %v878 = vmul.f32 %v866, %v874
        %v879 = vmul.f32 %v867, %v875
        %v880 = vmul.f32 %v868, %v876
        %v881 = vmul.f32 %v869, %v877
        %v882 = vmul.f32 %v878, 2.0
        %v883 = vmul.f32 %v879, 2.0
        %v884 = vmul.f32 %v880, 2.0
        %v885 = vmul.f32 %v881, 2.0
        %v886 = vsub.f32 1.0, %v882
        %v887 = vsub.f32 1.0, %v883
        %v888 = vsub.f32 1.0, %v884
        %v889 = vsub.f32 1.0, %v885
        %v890 = vmul.f32 %v886, %v831
        %v891 = vmul.f32 %v887, %v833
        %v892 = vmul.f32 %v888, %v838
        %v893 = vmul.f32 %v889, %v840
        %v894 = vld [vmem:[%s2] sm:$0xff]
        %v895 = vld [vmem:[%s2 + $0x8] sm:$0xff]
        %s896 = scalar_lea.vmem %s2, 16
        %v897 = vld [vmem:[%s896] sm:$0xff]
        %v898 = vld [vmem:[%s896 + $0x8] sm:$0xff]
        %900 = vset.pattern.permute.xlu0 0
        %901 = vperm.xlu0 %900, %v894
        %v902 = vpop.permute.xlu0 %901
        %905 = vset.pattern.permute.xlu0 0
        %906 = vperm.xlu0 %905, %v895
        %v907 = vpop.permute.xlu0 %906
        %v909 = vmul.f32 %v890, %v902
        %v910 = vmul.f32 %v891, %v902
        %v911 = vmul.f32 %v892, %v907
        %v912 = vmul.f32 %v893, %v907
        %914 = vset.pattern.permute.xlu0 0
        %915 = vperm.xlu0 %914, %v897
        %v916 = vpop.permute.xlu0 %915
        %919 = vset.pattern.permute.xlu0 0
        %920 = vperm.xlu0 %919, %v898
        %v921 = vpop.permute.xlu0 %920
        %v923 = vadd.f32 %v909, %v916
        %v924 = vadd.f32 %v910, %v916
        %v925 = vadd.f32 %v911, %v921
        %v926 = vadd.f32 %v912, %v921
        %927 = vst [vmem:[%s202] sm:$0xff] %v923
        %928 = vst [vmem:[%s202 + $0x8] sm:$0xff] %v924
        %929 = vst [vmem:[%s202 + $0x10] sm:$0xff] %v925
        %930 = vst [vmem:[%s202 + $0x18] sm:$0xff] %v926
        %s931 = sand.u32 %s90, 1
        %s932 = sand.u32 %s90, 1
        %s933 = smul.addr %s932, 32
        %s934 = scalar_lea.vmem [#allocation3], %s933
        // Predicated region
        $region56: #{fused_conv_mish_bn.1} parent=50 // pred_check
          %p935 = pneg %p100
        $region57: #{fused_conv_mish_bn.1} parent=50 // pred_check_branch
          %937 = sbr.rel (%p935) target = $region59
        $region58: #{fused_conv_mish_bn.1} parent=50 // pred_region
          %s938 = smul.u32 2, %s14
          %s939 = smul.addr %s938, 8
          %s940 = scalar_lea.vmem %s3, %s939
          // Predicated region
          $region60: #{fused_conv_mish_bn.1} parent=58 // pred_check
            _
          $region61: #{fused_conv_mish_bn.1} parent=58 // pred_check_branch
            %942 = sbr.rel (0) target = $region63
          $region62: #{fused_conv_mish_bn.1} parent=58 // pred_region
            // Predicated region
            $region64: #{fused_conv_mish_bn.1} parent=62 // pred_check
              _
            $region65: #{fused_conv_mish_bn.1} parent=62 // pred_check_branch
              %944 = sbr.rel (0) target = $region67
            $region66: #{fused_conv_mish_bn.1} parent=62 // pred_region
              loop: start=0, step=1, limit=1
              $region68: #{fused_conv_mish_bn.1} parent=66 // loop_pre_header
                _
              $region69: #{fused_conv_mish_bn.1} parent=66 // loop_header
                %s946 = sphi 0, %s950
                %p947 = scmp.ge.s32.totalorder %s946, 1
                %s951 = sphi %s934, %s934
                %s952 = sphi %s940, %s940
              $region70: #{fused_conv_mish_bn.1} parent=66 // loop_header_branch
                %949 = sbr.rel (%p947) target = $region74
              $region71: #{fused_conv_mish_bn.1} parent=66 // loop_body
                %v953 = vld [vmem:[%s951] sm:$0xff]
                %954 = vst [vmem:[%s952] sm:$0xff] %v953
                %v955 = vld [vmem:[%s951 + $0x8] sm:$0xff]
                %956 = vst [vmem:[%s952 + $0x8] sm:$0xff] %v955
                %v957 = vld [vmem:[%s951 + $0x10] sm:$0xff]
                %958 = vst [vmem:[%s952 + $0x20] sm:$0xff] %v957
                %v959 = vld [vmem:[%s951 + $0x18] sm:$0xff]
                %960 = vst [vmem:[%s952 + $0x28] sm:$0xff] %v959
              $region72: #{fused_conv_mish_bn.1} parent=66 // loop_footer
                %s950 = sadd.s32 1, %s946
              $region73: #{fused_conv_mish_bn.1} parent=66 // loop_footer_branch
                %945 = sbr.rel target = $region69
              $region74: #{fused_conv_mish_bn.1} parent=66 // loop_exit
                _
            $region67: #{fused_conv_mish_bn.1} parent=62 // pred_fallthru
              _
            // Predicated region
            $region75: #{fused_conv_mish_bn.1} parent=62 // pred_check
              _
            $region76: #{fused_conv_mish_bn.1} parent=62 // pred_check_branch
              %962 = sbr.rel target = $region78
            $region77: #{fused_conv_mish_bn.1} parent=62 // pred_region
              _
            $region78: #{fused_conv_mish_bn.1} parent=62 // pred_fallthru
              _
          $region63: #{fused_conv_mish_bn.1} parent=58 // pred_fallthru
            _
          %963 = vnop
        $region59: #{fused_conv_mish_bn.1} parent=50 // pred_fallthru
          _
      $region51: #{fused_conv_mish_bn.1} parent=5 // pred_fallthru
        _
      %p964 = scmp.le.s32.totalorder 2, %s9
      // Predicated region
      $region79: #{fused_conv_mish_bn.1} parent=5 // pred_check
        %p965 = pneg %p964
      $region80: #{fused_conv_mish_bn.1} parent=5 // pred_check_branch
        %967 = sbr.rel (%p965) target = $region82
      $region81: #{fused_conv_mish_bn.1} parent=5 // pred_region
        %s968 = ssub.s32 %s9, 2
        // Predicated region
        $region83: #{fused_conv_mish_bn.1} parent=81 // pred_check
          %p969 = pneg %p106
        $region84: #{fused_conv_mish_bn.1} parent=81 // pred_check_branch
          %971 = sbr.rel (%p969) target = $region86
        $region85: #{fused_conv_mish_bn.1} parent=81 // pred_region
          %s972 = sand.u32 %s91, 1
          %s973 = sand.u32 %s91, 1
          %s974 = smul.addr %s973, 32
          %s975 = scalar_lea.vmem [#allocation3], %s974
        $region86: #{fused_conv_mish_bn.1} parent=81 // pred_fallthru
          _
      $region82: #{fused_conv_mish_bn.1} parent=5 // pred_fallthru
        _
    $region6: #{fused_conv_mish_bn.1} parent=1 // loop_footer
      %s13 = sadd.s32 1, %s9
    $region7: #{fused_conv_mish_bn.1} parent=1 // loop_footer_branch
      %8 = sbr.rel target = $region3
    $region8: #{fused_conv_mish_bn.1} parent=1 // loop_exit
      _

</llo_original>
